<compile_context>
chip_gen: v7x
topology: tpu7x:2x2x1
jax: 0.10.0
libtpu: 0.0.40
codegen_flags: <defaults>
</compile_context>

<pallas_src>
import functools

import numpy as np
import jax
import jax.numpy as jnp
from jax import lax
from jax.experimental import pallas as pl
from jax.experimental.pallas import tpu as pltpu


def _round_up(x, m):
    return -(-x // m) * m


# ----------------------------------------------------------------------------
# Bilinear (align_corners=True) interpolation weights, built host-side (numpy)
# and cached per (H, W) so they are a jit-time constant.
# ----------------------------------------------------------------------------
def _interp_matrix_np(out_size, in_size):
    """Dense (out_size, in_size) bilinear weights, align_corners=True, f32."""
    if out_size > 1:
        scale = np.float32((in_size - 1) / (out_size - 1))
        coords = np.arange(out_size, dtype=np.float32) * scale
    else:
        coords = np.zeros((out_size,), np.float32)
    lo = np.floor(coords).astype(np.int64)
    hi = np.minimum(lo + 1, in_size - 1)
    frac = (coords - lo.astype(np.float32)).astype(np.float32)
    w = np.zeros((out_size, in_size), np.float32)
    w[np.arange(out_size), lo] += (1.0 - frac)
    w[np.arange(out_size), hi] += frac
    return w


@functools.lru_cache(maxsize=None)
def _pyramid_weight_np(H, W):
    """Stack kron(Wy_s, Wx_s) for stages 1..3 into one lane-padded matrix.

    Returns ((H*W, P) numpy f32 weight with P a multiple of 128, stage sizes)
    s.t. imgs2d (N, H*W) @ weight -> (N, P) holds all 3 downsampled stages.
    """
    assert H % 8 == 0 and W % 8 == 0, "pyramid assumes H, W divisible by 8"
    blocks, sizes = [], []
    for i in range(1, 4):
        ho, wo = H // 2 ** i, W // 2 ** i
        wy = _interp_matrix_np(ho, H)                    # (ho, H)
        wx = _interp_matrix_np(wo, W)                    # (wo, W)
        k = np.einsum("oh,pw->ophw", wy, wx).reshape(ho * wo, H * W)
        blocks.append(k)
        sizes.append((ho, wo))
    wall = np.concatenate(blocks, axis=0)                # (total, H*W)
    total = wall.shape[0]
    P = max(128, _round_up(total, 128))                  # lane-dense output
    wall = np.pad(wall, ((0, P - total), (0, 0)))
    return np.ascontiguousarray(wall.T).astype(np.float32), tuple(sizes)


# ----------------------------------------------------------------------------
# Single fused kernel writing ONE lane-dense (R, P) slab:
#   rows [0, N)                         : pyramid stages 1..3 (MXU matmul)
#   rows [proj_off + s*stride, +4*Nv)   : proj matrices, row n*4+i lanes 0..3
#   rows [dmm_off, +B)                  : lane 0 = depth min, lane 1 = max
# ----------------------------------------------------------------------------
def _fused_interface_kernel(imgs_ref, wkr_ref, k2d_ref, eb_ref, depth_ref,
                            slab_ref, *, n_img_rows, proj_off, stage_stride,
                            nv4, dmm_off):
    # (1) image pyramid, stages 1..3: one batched lane-dense MXU matmul.
    slab_ref[0:n_img_rows, :] = jnp.dot(
        imgs_ref[...], wkr_ref[...],
        preferred_element_type=jnp.float32,
        precision=lax.Precision.HIGHEST)

    # (2) projection matrices.  acc = K4 @ E computed ONCE (4 mul-adds on
    #     lane-padded, pre-broadcast extrinsics rows); each stage is just a
    #     row-masked scale of acc (row scaling commutes with the product).
    k = k2d_ref[...]                                     # (4*Nv, 4)
    acc = (k[:, 0:1] * eb_ref[0] + k[:, 1:2] * eb_ref[1]
           + k[:, 2:3] * eb_ref[2] + k[:, 3:4] * eb_ref[3])   # (4*Nv, P)
    row_id = lax.broadcasted_iota(jnp.int32, acc.shape, 0)
    top2 = (row_id % 4) < 2
    for s in range(4):
        ps = acc if s == 0 else jnp.where(top2, jnp.float32(0.5 ** s) * acc, acc)
        r0 = proj_off + s * stage_stride
        slab_ref[r0:r0 + nv4, :] = ps                    # full-lane store

    # (3) depth min / max, single lane-dense store (lane 0 = min, lane 1 = max).
    d = depth_ref[...]
    dmin = jnp.min(d, axis=1, keepdims=True)
    dmax = jnp.max(d, axis=1, keepdims=True)
    lane = lax.broadcasted_iota(jnp.int32, (d.shape[0], slab_ref.shape[1]), 1)
    slab_ref[dmm_off:dmm_off + d.shape[0], :] = (
        jnp.where(lane == 0, dmin, 0.0) + jnp.where(lane == 1, dmax, 0.0))


@jax.jit
def _simple_interface_preprocess(imgs, intrinsics, extrinsics, depth_values):
    B, V, C, H, W = imgs.shape
    N, Nv = B * V * C, B * V
    nv4 = 4 * Nv

    wkr_np, stage_sizes = _pyramid_weight_np(H, W)       # cached numpy const
    P = wkr_np.shape[1]

    imgs2d = imgs.reshape(N, H * W).astype(jnp.float32)

    # homogeneous intrinsics [[K,0],[0,1]], flattened to (4*Nv, 4) rows
    k3 = intrinsics.reshape(Nv, 3, 3).astype(jnp.float32)
    k_top = jnp.concatenate([k3, jnp.zeros((Nv, 3, 1), jnp.float32)], axis=2)
    k_bot = jnp.broadcast_to(
        jnp.array([0.0, 0.0, 0.0, 1.0], jnp.float32), (Nv, 1, 4))
    k2d = jnp.concatenate([k_top, k_bot], axis=1).reshape(nv4, 4)

    # eb[j, n*4+i, :] = extrinsics[n, j, :] zero-padded to P lanes (plumbing)
    e4 = extrinsics.reshape(Nv, 4, 4).astype(jnp.float32)
    eb = jnp.transpose(e4, (1, 0, 2))[:, :, None, :]      # (4, Nv, 1, 4)
    eb = jnp.broadcast_to(eb, (4, Nv, 4, 4)).reshape(4, nv4, 4)
    eb = jnp.pad(eb, ((0, 0), (0, 0), (0, P - 4)))

    dvals = depth_values.astype(jnp.float32)

    # packed slab layout, every region 8-row aligned
    proj_off = _round_up(N, 8)
    stage_stride = _round_up(nv4, 8)
    dmm_off = proj_off + 4 * stage_stride
    R = _round_up(dmm_off + B, 8)

    kernel = functools.partial(
        _fused_interface_kernel, n_img_rows=N, proj_off=proj_off,
        stage_stride=stage_stride, nv4=nv4, dmm_off=dmm_off)
    vmem = pl.BlockSpec(memory_space=pltpu.MemorySpace.VMEM)
    slab = pl.pallas_call(
        kernel,
        out_shape=jax.ShapeDtypeStruct((R, P), jnp.float32),
        in_specs=[vmem] * 5,
        out_specs=vmem,
        compiler_params=pltpu.CompilerParams(vmem_limit_bytes=32 * 1024 * 1024),
    )(imgs2d, jnp.asarray(wkr_np), k2d, eb, dvals)

    # stage_0 resize is the identity -> reuse the input directly (no kernel).
    imgs_stages = {"stage_0": imgs.astype(jnp.float32)}
    off = 0
    for i, (ho, wo) in enumerate(stage_sizes, start=1):
        n = ho * wo
        imgs_stages[f"stage_{i}"] = slab[:N, off:off + n].reshape(B, V, C, ho, wo)
        off += n

    proj_matrices = {}
    for s in range(4):
        r0 = proj_off + s * stage_stride
        proj_matrices[f"stage_{s}"] = slab[r0:r0 + nv4, :4].reshape(B, V, 4, 4)

    depth_min = slab[dmm_off:dmm_off + B, 0]
    depth_max = slab[dmm_off:dmm_off + B, 1]
    return proj_matrices, imgs_stages, depth_min, depth_max


# ----------------------------------------------------------------------------
# SimpleInterfaceNet (interface preprocessing only)
# ----------------------------------------------------------------------------
class SimpleInterfaceNet:
    def __init__(self):
        # The interface-level forward has no learnable parameters.
        self.all_outputs = {}

    def forward(self, imgs, intrinsics, extrinsics, depth_values, hints=None):
        proj_matrices, imgs_stages, depth_min, depth_max = (
            _simple_interface_preprocess(imgs, intrinsics, extrinsics,
                                         depth_values))

        validhints = None
        if hints is not None:
            validhints = (hints > 0).astype(jnp.float32)

        self.all_outputs = {
            "proj_matrices": proj_matrices,
            "imgs_stages": imgs_stages,
            "depth_min": depth_min,
            "depth_max": depth_max,
            "validhints": validhints,
        }
        # TODO(synk): PatchmatchNet(imgs_stages, proj_matrices, depth_min,
        # depth_max, hints, validhints) -> out['depth']['stage_0'] not available.
        return self.all_outputs


# ----------------------------------------------------------------------------
# main
# ----------------------------------------------------------------------------
if __name__ == "__main__":
    key = jax.random.PRNGKey(0)
    kb, kk, ke, kd = jax.random.split(key, 4)

    B, V, C, H, W, D = 2, 3, 3, 16, 16, 8

    imgs = jax.random.uniform(kb, (B, V, C, H, W), jnp.float32)

    base_k = jnp.array([[8.0, 0.0, 8.0],
                        [0.0, 8.0, 8.0],
                        [0.0, 0.0, 1.0]], jnp.float32)
    intrinsics = base_k[None, None] + 0.01 * jax.random.normal(kk, (B, V, 3, 3))

    extrinsics = jnp.tile(jnp.eye(4, dtype=jnp.float32), (B, V, 1, 1))
    extrinsics = extrinsics + 0.05 * jax.random.normal(ke, (B, V, 4, 4)) * (
        jnp.arange(4)[:, None] < 3)

    depth_values = 0.5 + 1.5 * jax.random.uniform(kd, (B, D), jnp.float32)

    net = SimpleInterfaceNet()
    out = net.forward(imgs, intrinsics, extrinsics, depth_values)
    jax.block_until_ready(jax.tree_util.tree_leaves(out))

    # ---- lightweight numerical checks against a pure-JAX reference ----
    Nv = B * V
    N = B * V * C

    # projection matrices
    e4 = extrinsics.reshape(Nv, 4, 4)
    k3 = intrinsics.reshape(Nv, 3, 3)
    for i in range(4):
        ks = k3.at[:, :2, :].multiply(1.0 / (2 ** i))
        top = jnp.einsum("nij,njk->nik", ks, e4[:, :3, :])
        ref = jnp.concatenate([top, e4[:, 3:4, :]], axis=1).reshape(B, V, 4, 4)
        assert jnp.allclose(out["proj_matrices"][f"stage_{i}"], ref, atol=1e-4)

    # image pyramid (stage_0 is the identity; stages 1..3 are bilinear)
    flat = imgs.reshape(N, H, W)
    assert jnp.array_equal(out["imgs_stages"]["stage_0"], imgs)
    for i in range(1, 4):
        hh, ww = H // (2 ** i), W // (2 ** i)
        wy = jnp.asarray(_interp_matrix_np(hh, H))
        wx = jnp.asarray(_interp_matrix_np(ww, W))
        ref = jnp.einsum("oh,nhw,pw->nop", wy, flat, wx,
                         precision=lax.Precision.HIGHEST)
        ref = ref.reshape(B, V, C, hh, ww)
        assert jnp.allclose(out["imgs_stages"][f"stage_{i}"], ref, atol=1e-4)

    # depth range
    assert jnp.allclose(out["depth_min"], depth_values.min(axis=1), atol=1e-6)
    assert jnp.allclose(out["depth_max"], depth_values.max(axis=1), atol=1e-6)

    print("KERNEL_OK")
</pallas_src>

<mosaic_0001>
module attributes {stable_mosaic.version = 11 : i64} {
  func.func @_fused_interface_kernel(%arg0: memref<18x256xf32, #tpu.memory_space<vmem>>, %arg1: memref<256x128xf32, #tpu.memory_space<vmem>>, %arg2: memref<24x4xf32, #tpu.memory_space<vmem>>, %arg3: memref<4x24x128xf32, #tpu.memory_space<vmem>>, %arg4: memref<2x8xf32, #tpu.memory_space<vmem>>, %arg5: memref<128x128xf32, #tpu.memory_space<vmem>>) attributes {dimension_semantics = [], scalar_prefetch = 0 : i64, scratch_operands = 0 : i64, tpu.core_type = #tpu.core_type<tc>} {
    %c0 = arith.constant 0 : index
    %c0_0 = arith.constant 0 : index
    %0 = vector.load %arg0[%c0, %c0_0] : memref<18x256xf32, #tpu.memory_space<vmem>>, vector<18x256xf32>
    %c0_1 = arith.constant 0 : index
    %c0_2 = arith.constant 0 : index
    %1 = vector.load %arg1[%c0_1, %c0_2] : memref<256x128xf32, #tpu.memory_space<vmem>>, vector<256x128xf32>
    %cst = arith.constant dense<0.000000e+00> : vector<18x128xf32>
    %2 = tpu.matmul %0, %1, %cst {dimension_numbers = #tpu.dot_dimension_numbers<[1], [0], [0], [1], [0, 0, 1, 1], [], []>, precision = #tpu.contract_precision<fp32>} : vector<18x256xf32>, vector<256x128xf32>, vector<18x128xf32> -> vector<18x128xf32>
    %c0_3 = arith.constant 0 : index
    %c0_4 = arith.constant 0 : index
    %3 = vector.load %arg5[%c0_3, %c0_4] : memref<128x128xf32, #tpu.memory_space<vmem>>, vector<18x128xf32>
    tpu.vector_store %arg5[%c0_3, %c0_4], %2 {strides = array<i32>} : memref<128x128xf32, #tpu.memory_space<vmem>>, vector<18x128xf32>,
    %c0_5 = arith.constant 0 : index
    %c0_6 = arith.constant 0 : index
    %4 = vector.load %arg2[%c0_5, %c0_6] : memref<24x4xf32, #tpu.memory_space<vmem>>, vector<24x4xf32>
    %5 = vector.extract_strided_slice %4 {offsets = [0, 0], sizes = [24, 1], strides = [1, 1]} : vector<24x4xf32> to vector<24x1xf32>
    %c0_7 = arith.constant 0 : index
    %c0_8 = arith.constant 0 : index
    %c0_9 = arith.constant 0 : index
    %6 = vector.load %arg3[%c0_7, %c0_8, %c0_9] : memref<4x24x128xf32, #tpu.memory_space<vmem>>, vector<1x24x128xf32>
    %7 = vector.shape_cast %6 : vector<1x24x128xf32> to vector<24x128xf32>
    %8 = vector.broadcast %5 : vector<24x1xf32> to vector<24x128xf32>
    %9 = arith.mulf %8, %7 : vector<24x128xf32>
    %10 = vector.extract_strided_slice %4 {offsets = [0, 1], sizes = [24, 1], strides = [1, 1]} : vector<24x4xf32> to vector<24x1xf32>
    %c1 = arith.constant 1 : index
    %c0_10 = arith.constant 0 : index
    %c0_11 = arith.constant 0 : index
    %11 = vector.load %arg3[%c1, %c0_10, %c0_11] : memref<4x24x128xf32, #tpu.memory_space<vmem>>, vector<1x24x128xf32>
    %12 = vector.shape_cast %11 : vector<1x24x128xf32> to vector<24x128xf32>
    %13 = vector.broadcast %10 : vector<24x1xf32> to vector<24x128xf32>
    %14 = arith.mulf %13, %12 : vector<24x128xf32>
    %15 = arith.addf %9, %14 : vector<24x128xf32>
    %16 = vector.extract_strided_slice %4 {offsets = [0, 2], sizes = [24, 1], strides = [1, 1]} : vector<24x4xf32> to vector<24x1xf32>
    %c2 = arith.constant 2 : index
    %c0_12 = arith.constant 0 : index
    %c0_13 = arith.constant 0 : index
    %17 = vector.load %arg3[%c2, %c0_12, %c0_13] : memref<4x24x128xf32, #tpu.memory_space<vmem>>, vector<1x24x128xf32>
    %18 = vector.shape_cast %17 : vector<1x24x128xf32> to vector<24x128xf32>
    %19 = vector.broadcast %16 : vector<24x1xf32> to vector<24x128xf32>
    %20 = arith.mulf %19, %18 : vector<24x128xf32>
    %21 = arith.addf %15, %20 : vector<24x128xf32>
    %22 = vector.extract_strided_slice %4 {offsets = [0, 3], sizes = [24, 1], strides = [1, 1]} : vector<24x4xf32> to vector<24x1xf32>
    %c3 = arith.constant 3 : index
    %c0_14 = arith.constant 0 : index
    %c0_15 = arith.constant 0 : index
    %23 = vector.load %arg3[%c3, %c0_14, %c0_15] : memref<4x24x128xf32, #tpu.memory_space<vmem>>, vector<1x24x128xf32>
    %24 = vector.shape_cast %23 : vector<1x24x128xf32> to vector<24x128xf32>
    %25 = vector.broadcast %22 : vector<24x1xf32> to vector<24x128xf32>
    %26 = arith.mulf %25, %24 : vector<24x128xf32>
    %27 = arith.addf %21, %26 : vector<24x128xf32>
    %28 = tpu.iota {dimensions = array<i32: 0>} : vector<24x128xi32>
    %c4_i32 = arith.constant 4 : i32
    %c0_i32 = arith.constant 0 : i32
    %29 = arith.cmpi eq, %c4_i32, %c0_i32 : i32
    %c1_i32 = arith.constant 1 : i32
    %30 = arith.select %29, %c1_i32, %c4_i32 : i32
    %31 = vector.broadcast %30 : i32 to vector<24x128xi32>
    %32 = arith.remsi %28, %31 : vector<24x128xi32>
    %c0_i32_16 = arith.constant 0 : i32
    %33 = vector.broadcast %c0_i32_16 : i32 to vector<24x128xi32>
    %34 = arith.cmpi ne, %32, %33 : vector<24x128xi32>
    %c0_i32_17 = arith.constant 0 : i32
    %35 = vector.broadcast %c0_i32_17 : i32 to vector<24x128xi32>
    %36 = arith.cmpi slt, %32, %35 : vector<24x128xi32>
    %c0_i32_18 = arith.constant 0 : i32
    %37 = arith.cmpi slt, %30, %c0_i32_18 : i32
    %38 = vector.broadcast %37 : i1 to vector<24x128xi1>
    %39 = vector.broadcast %38 : vector<24x128xi1> to vector<24x128xi1>
    %40 = arith.xori %36, %39 : vector<24x128xi1>
    %41 = arith.andi %40, %34 : vector<24x128xi1>
    %42 = vector.broadcast %30 : i32 to vector<24x128xi32>
    %43 = arith.addi %32, %42 : vector<24x128xi32>
    %44 = arith.select %41, %43, %32 : vector<24x128xi1>, vector<24x128xi32>
    %c2_i32 = arith.constant 2 : i32
    %45 = vector.broadcast %c2_i32 : i32 to vector<24x128xi32>
    %46 = arith.cmpi slt, %44, %45 : vector<24x128xi32>
    %c24 = arith.constant 24 : index
    %c0_19 = arith.constant 0 : index
    %47 = vector.load %arg5[%c24, %c0_19] : memref<128x128xf32, #tpu.memory_space<vmem>>, vector<24x128xf32>
    tpu.vector_store %arg5[%c24, %c0_19], %27 {strides = array<i32>} : memref<128x128xf32, #tpu.memory_space<vmem>>, vector<24x128xf32>,
    %cst_20 = arith.constant 5.000000e-01 : f32
    %48 = vector.broadcast %cst_20 : f32 to vector<24x128xf32>
    %49 = arith.mulf %48, %27 : vector<24x128xf32>
    %50 = arith.select %46, %49, %27 : vector<24x128xi1>, vector<24x128xf32>
    %c48 = arith.constant 48 : index
    %c0_21 = arith.constant 0 : index
    %51 = vector.load %arg5[%c48, %c0_21] : memref<128x128xf32, #tpu.memory_space<vmem>>, vector<24x128xf32>
    tpu.vector_store %arg5[%c48, %c0_21], %50 {strides = array<i32>} : memref<128x128xf32, #tpu.memory_space<vmem>>, vector<24x128xf32>,
    %cst_22 = arith.constant 2.500000e-01 : f32
    %52 = vector.broadcast %cst_22 : f32 to vector<24x128xf32>
    %53 = arith.mulf %52, %27 : vector<24x128xf32>
    %54 = arith.select %46, %53, %27 : vector<24x128xi1>, vector<24x128xf32>
    %c72 = arith.constant 72 : index
    %c0_23 = arith.constant 0 : index
    %55 = vector.load %arg5[%c72, %c0_23] : memref<128x128xf32, #tpu.memory_space<vmem>>, vector<24x128xf32>
    tpu.vector_store %arg5[%c72, %c0_23], %54 {strides = array<i32>} : memref<128x128xf32, #tpu.memory_space<vmem>>, vector<24x128xf32>,
    %cst_24 = arith.constant 1.250000e-01 : f32
    %56 = vector.broadcast %cst_24 : f32 to vector<24x128xf32>
    %57 = arith.mulf %56, %27 : vector<24x128xf32>
    %58 = arith.select %46, %57, %27 : vector<24x128xi1>, vector<24x128xf32>
    %c96 = arith.constant 96 : index
    %c0_25 = arith.constant 0 : index
    %59 = vector.load %arg5[%c96, %c0_25] : memref<128x128xf32, #tpu.memory_space<vmem>>, vector<24x128xf32>
    tpu.vector_store %arg5[%c96, %c0_25], %58 {strides = array<i32>} : memref<128x128xf32, #tpu.memory_space<vmem>>, vector<24x128xf32>,
    %c0_26 = arith.constant 0 : index
    %c0_27 = arith.constant 0 : index
    %60 = vector.load %arg4[%c0_26, %c0_27] : memref<2x8xf32, #tpu.memory_space<vmem>>, vector<2x8xf32>
    %cst_28 = arith.constant dense<0x7F800000> : vector<2xf32>
    %61 = vector.multi_reduction <minimumf>, %60, %cst_28 [1] : vector<2x8xf32> to vector<2xf32>
    %62 = vector.shape_cast %61 : vector<2xf32> to vector<2x1xf32>
    %cst_29 = arith.constant dense<0xFF800000> : vector<2xf32>
    %63 = vector.multi_reduction <maximumf>, %60, %cst_29 [1] : vector<2x8xf32> to vector<2xf32>
    %64 = vector.shape_cast %63 : vector<2xf32> to vector<2x1xf32>
    %65 = tpu.iota {dimensions = array<i32: 1>} : vector<2x128xi32>
    %c0_i32_30 = arith.constant 0 : i32
    %66 = vector.broadcast %c0_i32_30 : i32 to vector<2x128xi32>
    %67 = arith.cmpi eq, %65, %66 : vector<2x128xi32>
    %cst_31 = arith.constant 0.000000e+00 : f32
    %68 = vector.shape_cast %62 : vector<2x1xf32> to vector<2x1xf32>
    %69 = vector.broadcast %68 : vector<2x1xf32> to vector<2x128xf32>
    %70 = vector.broadcast %cst_31 : f32 to vector<2x128xf32>
    %71 = arith.select %67, %69, %70 : vector<2x128xi1>, vector<2x128xf32>
    %c1_i32_32 = arith.constant 1 : i32
    %72 = vector.broadcast %c1_i32_32 : i32 to vector<2x128xi32>
    %73 = arith.cmpi eq, %65, %72 : vector<2x128xi32>
    %cst_33 = arith.constant 0.000000e+00 : f32
    %74 = vector.shape_cast %64 : vector<2x1xf32> to vector<2x1xf32>
    %75 = vector.broadcast %74 : vector<2x1xf32> to vector<2x128xf32>
    %76 = vector.broadcast %cst_33 : f32 to vector<2x128xf32>
    %77 = arith.select %73, %75, %76 : vector<2x128xi1>, vector<2x128xf32>
    %78 = arith.addf %71, %77 : vector<2x128xf32>
    %c120 = arith.constant 120 : index
    %c0_34 = arith.constant 0 : index
    %79 = vector.load %arg5[%c120, %c0_34] : memref<128x128xf32, #tpu.memory_space<vmem>>, vector<2x128xf32>
    tpu.vector_store %arg5[%c120, %c0_34], %78 {strides = array<i32>} : memref<128x128xf32, #tpu.memory_space<vmem>>, vector<2x128xf32>,
    return
  }
}

</mosaic_0001>

<llo_original>
// kernel: _simple_interface_preprocess.1
$region0: #{_simple_interface_preprocess.1}
  #allocation0 [shape = 'u32[]', space=smem, size = 0x4, offset = 0x4, fixed_abs, tag = 'smem constant byte address 0x4 - core index']
  #allocation1 [shape = 'u32[144,128]{1,0:T(1,128)}', space=vmem, size = 0x12000, scoped, tag = 'internal scratch']
  %s0 = inlined_call_operand.vmem [shape: f32[18,256], index: 0, kind: input, shape index: {}]
  %s1 = inlined_call_operand.vmem [shape: f32[256,128], index: 1, kind: input, shape index: {}]
  %s2 = inlined_call_operand.vmem [shape: f32[24,4], index: 2, kind: input, shape index: {}]
  %s3 = inlined_call_operand.vmem [shape: f32[4,24,128], index: 3, kind: input, shape index: {}]
  %s4 = inlined_call_operand.vmem [shape: f32[2,8], index: 4, kind: input, shape index: {}]
  %s5 = inlined_call_operand.vmem [shape: f32[128,128], index: 5, kind: output, shape index: {}]
  %s6 = sld [smem:[#allocation0]]
  $region30: #{_simple_interface_preprocess.1} parent=0
    _
  %s8 = ssub.s32 1, %s6
  %s9 = scalar_select 0, %s8, %s6
  // Predicated region
  $region2: #{_simple_interface_preprocess.1} parent=0 // pred_check
    _
  $region3: #{_simple_interface_preprocess.1} parent=0 // pred_check_branch
    %11 = sbr.rel (0) target = $region5
  $region4: #{_simple_interface_preprocess.1} parent=0 // pred_region
    _
  $region5: #{_simple_interface_preprocess.1} parent=0 // pred_fallthru
    _
  // Predicated region
  $region6: #{_simple_interface_preprocess.1} parent=0 // pred_check
    _
  $region7: #{_simple_interface_preprocess.1} parent=0 // pred_check_branch
    %13 = sbr.rel (0) target = $region9
  $region8: #{_simple_interface_preprocess.1} parent=0 // pred_region
    _
  $region9: #{_simple_interface_preprocess.1} parent=0 // pred_fallthru
    _
  // Predicated region
  $region10: #{_simple_interface_preprocess.1} parent=0 // pred_check
    _
  $region11: #{_simple_interface_preprocess.1} parent=0 // pred_check_branch
    %15 = sbr.rel (0) target = $region13
  $region12: #{_simple_interface_preprocess.1} parent=0 // pred_region
    _
  $region13: #{_simple_interface_preprocess.1} parent=0 // pred_fallthru
    _
  // Predicated region
  $region14: #{_simple_interface_preprocess.1} parent=0 // pred_check
    _
  $region15: #{_simple_interface_preprocess.1} parent=0 // pred_check_branch
    %17 = sbr.rel (0) target = $region17
  $region16: #{_simple_interface_preprocess.1} parent=0 // pred_region
    _
  $region17: #{_simple_interface_preprocess.1} parent=0 // pred_fallthru
    _
  // Predicated region
  $region18: #{_simple_interface_preprocess.1} parent=0 // pred_check
    _
  $region19: #{_simple_interface_preprocess.1} parent=0 // pred_check_branch
    %19 = sbr.rel (0) target = $region21
  $region20: #{_simple_interface_preprocess.1} parent=0 // pred_region
    _
  $region21: #{_simple_interface_preprocess.1} parent=0 // pred_fallthru
    _
  %v20 = vld [vmem:[%s0] sm:$0xff]
  %v21 = vld [vmem:[%s0 + $0x8] sm:$0xff]
  %v22 = vld [vmem:[%s0 + $0x10] sm:$0xff]
  %v23 = vld [vmem:[%s0 + $0x18] sm:$0xff]
  %v24 = vld [vmem:[%s0 + $0x20] sm:$0x3]
  %v25 = vld [vmem:[%s0 + $0x28] sm:$0x3]
  %v26 = vld [vmem:[%s1] sm:$0xff]
  %v27 = vld [vmem:[%s1 + $0x8] sm:$0xff]
  %v28 = vld [vmem:[%s1 + $0x10] sm:$0xff]
  %v29 = vld [vmem:[%s1 + $0x18] sm:$0xff]
  %v30 = vld [vmem:[%s1 + $0x20] sm:$0xff]
  %v31 = vld [vmem:[%s1 + $0x28] sm:$0xff]
  %v32 = vld [vmem:[%s1 + $0x30] sm:$0xff]
  %v33 = vld [vmem:[%s1 + $0x38] sm:$0xff]
  %v34 = vld [vmem:[%s1 + $0x40] sm:$0xff]
  %v35 = vld [vmem:[%s1 + $0x48] sm:$0xff]
  %v36 = vld [vmem:[%s1 + $0x50] sm:$0xff]
  %v37 = vld [vmem:[%s1 + $0x58] sm:$0xff]
  %v38 = vld [vmem:[%s1 + $0x60] sm:$0xff]
  %v39 = vld [vmem:[%s1 + $0x68] sm:$0xff]
  %v40 = vld [vmem:[%s1 + $0x70] sm:$0xff]
  %v41 = vld [vmem:[%s1 + $0x78] sm:$0xff]
  %v42 = vld [vmem:[%s1 + $0x80] sm:$0xff]
  %v43 = vld [vmem:[%s1 + $0x88] sm:$0xff]
  %v44 = vld [vmem:[%s1 + $0x90] sm:$0xff]
  %v45 = vld [vmem:[%s1 + $0x98] sm:$0xff]
  %v46 = vld [vmem:[%s1 + $0xa0] sm:$0xff]
  %v47 = vld [vmem:[%s1 + $0xa8] sm:$0xff]
  %v48 = vld [vmem:[%s1 + $0xb0] sm:$0xff]
  %v49 = vld [vmem:[%s1 + $0xb8] sm:$0xff]
  %v50 = vld [vmem:[%s1 + $0xc0] sm:$0xff]
  %v51 = vld [vmem:[%s1 + $0xc8] sm:$0xff]
  %v52 = vld [vmem:[%s1 + $0xd0] sm:$0xff]
  %v53 = vld [vmem:[%s1 + $0xd8] sm:$0xff]
  %v54 = vld [vmem:[%s1 + $0xe0] sm:$0xff]
  %v55 = vld [vmem:[%s1 + $0xe8] sm:$0xff]
  %v56 = vld [vmem:[%s1 + $0xf0] sm:$0xff]
  %v57 = vld [vmem:[%s1 + $0xf8] sm:$0xff]
  %58 = vmatprep.subr.mxu0 0.0
  %v59 = vand.u32 %v26, 4294901760
  %60 = vmatpush1.msra.mxu0 %v59
  %61 = vmatprep.subr.mxu0 0.0
  %v62 = vand.u32 %v27, 4294901760
  %63 = vmatpush1.msra.mxu0 %v62
  %64 = vmatprep.subr.mxu0 0.0
  %v65 = vand.u32 %v28, 4294901760
  %66 = vmatpush1.msra.mxu0 %v65
  %67 = vmatprep.subr.mxu0 0.0
  %v68 = vand.u32 %v29, 4294901760
  %69 = vmatpush1.msra.mxu0 %v68
  %70 = vmatprep.subr.mxu0 0.0
  %v71 = vand.u32 %v30, 4294901760
  %72 = vmatpush1.msra.mxu0 %v71
  %73 = vmatprep.subr.mxu0 0.0
  %v74 = vand.u32 %v31, 4294901760
  %75 = vmatpush1.msra.mxu0 %v74
  %76 = vmatprep.subr.mxu0 0.0
  %v77 = vand.u32 %v32, 4294901760
  %78 = vmatpush1.msra.mxu0 %v77
  %79 = vmatprep.subr.mxu0 0.0
  %v80 = vand.u32 %v33, 4294901760
  %81 = vmatpush1.msra.mxu0 %v80
  %82 = vmatprep.subr.mxu0 0.0
  %v83 = vand.u32 %v34, 4294901760
  %84 = vmatpush1.msra.mxu0 %v83
  %85 = vmatprep.subr.mxu0 0.0
  %v86 = vand.u32 %v35, 4294901760
  %87 = vmatpush1.msra.mxu0 %v86
  %88 = vmatprep.subr.mxu0 0.0
  %v89 = vand.u32 %v36, 4294901760
  %90 = vmatpush1.msra.mxu0 %v89
  %91 = vmatprep.subr.mxu0 0.0
  %v92 = vand.u32 %v37, 4294901760
  %93 = vmatpush1.msra.mxu0 %v92
  %94 = vmatprep.subr.mxu0 0.0
  %v95 = vand.u32 %v38, 4294901760
  %96 = vmatpush1.msra.mxu0 %v95
  %97 = vmatprep.subr.mxu0 0.0
  %v98 = vand.u32 %v39, 4294901760
  %99 = vmatpush1.msra.mxu0 %v98
  %100 = vmatprep.subr.mxu0 0.0
  %v101 = vand.u32 %v40, 4294901760
  %102 = vmatpush1.msra.mxu0 %v101
  %103 = vmatprep.subr.mxu0 0.0
  %v104 = vand.u32 %v41, 4294901760
  %105 = vmatpush1.msra.mxu0 %v104
  %106 = vmatprep.subr.mxu0 0.0
  %v107 = vand.u32 %v42, 4294901760
  %108 = vmatpush1.msra.mxu0 %v107
  %109 = vmatprep.subr.mxu0 0.0
  %v110 = vand.u32 %v43, 4294901760
  %111 = vmatpush1.msra.mxu0 %v110
  %112 = vmatprep.subr.mxu0 0.0
  %v113 = vand.u32 %v44, 4294901760
  %114 = vmatpush1.msra.mxu0 %v113
  %115 = vmatprep.subr.mxu0 0.0
  %v116 = vand.u32 %v45, 4294901760
  %117 = vmatpush1.msra.mxu0 %v116
  %118 = vmatprep.subr.mxu0 0.0
  %v119 = vand.u32 %v46, 4294901760
  %120 = vmatpush1.msra.mxu0 %v119
  %121 = vmatprep.subr.mxu0 0.0
  %v122 = vand.u32 %v47, 4294901760
  %123 = vmatpush1.msra.mxu0 %v122
  %124 = vmatprep.subr.mxu0 0.0
  %v125 = vand.u32 %v48, 4294901760
  %126 = vmatpush1.msra.mxu0 %v125
  %127 = vmatprep.subr.mxu0 0.0
  %v128 = vand.u32 %v49, 4294901760
  %129 = vmatpush1.msra.mxu0 %v128
  %130 = vmatprep.subr.mxu0 0.0
  %v131 = vand.u32 %v50, 4294901760
  %132 = vmatpush1.msra.mxu0 %v131
  %133 = vmatprep.subr.mxu0 0.0
  %v134 = vand.u32 %v51, 4294901760
  %135 = vmatpush1.msra.mxu0 %v134
  %136 = vmatprep.subr.mxu0 0.0
  %v137 = vand.u32 %v52, 4294901760
  %138 = vmatpush1.msra.mxu0 %v137
  %139 = vmatprep.subr.mxu0 0.0
  %v140 = vand.u32 %v53, 4294901760
  %141 = vmatpush1.msra.mxu0 %v140
  %142 = vmatprep.subr.mxu0 0.0
  %v143 = vand.u32 %v54, 4294901760
  %144 = vmatpush1.msra.mxu0 %v143
  %145 = vmatprep.subr.mxu0 0.0
  %v146 = vand.u32 %v55, 4294901760
  %147 = vmatpush1.msra.mxu0 %v146
  %148 = vmatprep.subr.mxu0 0.0
  %v149 = vand.u32 %v56, 4294901760
  %150 = vmatpush1.msra.mxu0 %v149
  %151 = vmatprep.subr.mxu0 0.0
  %v152 = vand.u32 %v57, 4294901760
  %153 = vmatpush1.msra.mxu0 %v152
  %v154 = vand.u32 %v21, 4294901760
  %v155 = vsub.f32 %v21, %v154
  %v156 = vand.u32 %v155, 4294901760
  %v157 = vsub.f32 %v155, %v156
  %v158 = vand.u32 %v157, 4294901760
  %159 = vmatprep.mubr.f32.mxu0 %v158
  %v160 = vand.u32 %v20, 4294901760
  %v161 = vsub.f32 %v20, %v160
  %v162 = vand.u32 %v161, 4294901760
  %v163 = vsub.f32 %v161, %v162
  %v164 = vand.u32 %v163, 4294901760
  %165 = vmatmul.mubr.f32.gmra.mrb[0].mxu0 %v164
  %v166 = vpop.f32.mrb[0].mxu0
  %v167 = vadd.f32 0.0, %v166
  %v168 = vpop.f32.mrb[0].mxu0
  %v169 = vand.u32 %v23, 4294901760
  %v170 = vsub.f32 %v23, %v169
  %v171 = vand.u32 %v170, 4294901760
  %v172 = vsub.f32 %v170, %v171
  %v173 = vand.u32 %v172, 4294901760
  %174 = vmatprep.mubr.f32.mxu0 %v173
  %v175 = vand.u32 %v22, 4294901760
  %v176 = vsub.f32 %v22, %v175
  %v177 = vand.u32 %v176, 4294901760
  %v178 = vsub.f32 %v176, %v177
  %v179 = vand.u32 %v178, 4294901760
  %180 = vmatmul.mubr.f32.gmra.mrb[0].mxu0 %v179
  %v181 = vpop.f32.mrb[0].mxu0
  %v182 = vadd.f32 0.0, %v181
  %v183 = vpop.f32.mrb[0].mxu0
  %v184 = vand.u32 %v25, 4294901760
  %v185 = vsub.f32 %v25, %v184
  %v186 = vand.u32 %v185, 4294901760
  %v187 = vsub.f32 %v185, %v186
  %v188 = vand.u32 %v187, 4294901760
  %189 = vmatprep.mubr.f32.mxu0 %v188
  %v190 = vand.u32 %v24, 4294901760
  %v191 = vsub.f32 %v24, %v190
  %v192 = vand.u32 %v191, 4294901760
  %v193 = vsub.f32 %v191, %v192
  %v194 = vand.u32 %v193, 4294901760
  %195 = vmatmul.mubr.f32.gmra.mrb[0].mxu0 %v194
  %v196 = vpop.f32.mrb[0].mxu0
  %v197 = vadd.f32 0.0, %v196
  %v198 = vpop.f32.mrb[0].mxu0
  %199 = vdwg.mxu0
  %200 = vmatprep.subr.mxu0 0.0
  %v201 = vand.u32 %v26, 4294901760
  %v202 = vsub.f32 %v26, %v201
  %v203 = vand.u32 %v202, 4294901760
  %v204 = vsub.f32 %v202, %v203
  %v205 = vand.u32 %v204, 4294901760
  %206 = vmatpush1.msra.mxu0 %v205
  %207 = vmatprep.subr.mxu0 0.0
  %v208 = vand.u32 %v27, 4294901760
  %v209 = vsub.f32 %v27, %v208
  %v210 = vand.u32 %v209, 4294901760
  %v211 = vsub.f32 %v209, %v210
  %v212 = vand.u32 %v211, 4294901760
  %213 = vmatpush1.msra.mxu0 %v212
  %214 = vmatprep.subr.mxu0 0.0
  %v215 = vand.u32 %v28, 4294901760
  %v216 = vsub.f32 %v28, %v215
  %v217 = vand.u32 %v216, 4294901760
  %v218 = vsub.f32 %v216, %v217
  %v219 = vand.u32 %v218, 4294901760
  %220 = vmatpush1.msra.mxu0 %v219
  %221 = vmatprep.subr.mxu0 0.0
  %v222 = vand.u32 %v29, 4294901760
  %v223 = vsub.f32 %v29, %v222
  %v224 = vand.u32 %v223, 4294901760
  %v225 = vsub.f32 %v223, %v224
  %v226 = vand.u32 %v225, 4294901760
  %227 = vmatpush1.msra.mxu0 %v226
  %228 = vmatprep.subr.mxu0 0.0
  %v229 = vand.u32 %v30, 4294901760
  %v230 = vsub.f32 %v30, %v229
  %v231 = vand.u32 %v230, 4294901760
  %v232 = vsub.f32 %v230, %v231
  %v233 = vand.u32 %v232, 4294901760
  %234 = vmatpush1.msra.mxu0 %v233
  %235 = vmatprep.subr.mxu0 0.0
  %v236 = vand.u32 %v31, 4294901760
  %v237 = vsub.f32 %v31, %v236
  %v238 = vand.u32 %v237, 4294901760
  %v239 = vsub.f32 %v237, %v238
  %v240 = vand.u32 %v239, 4294901760
  %241 = vmatpush1.msra.mxu0 %v240
  %242 = vmatprep.subr.mxu0 0.0
  %v243 = vand.u32 %v32, 4294901760
  %v244 = vsub.f32 %v32, %v243
  %v245 = vand.u32 %v244, 4294901760
  %v246 = vsub.f32 %v244, %v245
  %v247 = vand.u32 %v246, 4294901760
  %248 = vmatpush1.msra.mxu0 %v247
  %249 = vmatprep.subr.mxu0 0.0
  %v250 = vand.u32 %v33, 4294901760
  %v251 = vsub.f32 %v33, %v250
  %v252 = vand.u32 %v251, 4294901760
  %v253 = vsub.f32 %v251, %v252
  %v254 = vand.u32 %v253, 4294901760
  %255 = vmatpush1.msra.mxu0 %v254
  %256 = vmatprep.subr.mxu0 0.0
  %v257 = vand.u32 %v34, 4294901760
  %v258 = vsub.f32 %v34, %v257
  %v259 = vand.u32 %v258, 4294901760
  %v260 = vsub.f32 %v258, %v259
  %v261 = vand.u32 %v260, 4294901760
  %262 = vmatpush1.msra.mxu0 %v261
  %263 = vmatprep.subr.mxu0 0.0
  %v264 = vand.u32 %v35, 4294901760
  %v265 = vsub.f32 %v35, %v264
  %v266 = vand.u32 %v265, 4294901760
  %v267 = vsub.f32 %v265, %v266
  %v268 = vand.u32 %v267, 4294901760
  %269 = vmatpush1.msra.mxu0 %v268
  %270 = vmatprep.subr.mxu0 0.0
  %v271 = vand.u32 %v36, 4294901760
  %v272 = vsub.f32 %v36, %v271
  %v273 = vand.u32 %v272, 4294901760
  %v274 = vsub.f32 %v272, %v273
  %v275 = vand.u32 %v274, 4294901760
  %276 = vmatpush1.msra.mxu0 %v275
  %277 = vmatprep.subr.mxu0 0.0
  %v278 = vand.u32 %v37, 4294901760
  %v279 = vsub.f32 %v37, %v278
  %v280 = vand.u32 %v279, 4294901760
  %v281 = vsub.f32 %v279, %v280
  %v282 = vand.u32 %v281, 4294901760
  %283 = vmatpush1.msra.mxu0 %v282
  %284 = vmatprep.subr.mxu0 0.0
  %v285 = vand.u32 %v38, 4294901760
  %v286 = vsub.f32 %v38, %v285
  %v287 = vand.u32 %v286, 4294901760
  %v288 = vsub.f32 %v286, %v287
  %v289 = vand.u32 %v288, 4294901760
  %290 = vmatpush1.msra.mxu0 %v289
  %291 = vmatprep.subr.mxu0 0.0
  %v292 = vand.u32 %v39, 4294901760
  %v293 = vsub.f32 %v39, %v292
  %v294 = vand.u32 %v293, 4294901760
  %v295 = vsub.f32 %v293, %v294
  %v296 = vand.u32 %v295, 4294901760
  %297 = vmatpush1.msra.mxu0 %v296
  %298 = vmatprep.subr.mxu0 0.0
  %v299 = vand.u32 %v40, 4294901760
  %v300 = vsub.f32 %v40, %v299
  %v301 = vand.u32 %v300, 4294901760
  %v302 = vsub.f32 %v300, %v301
  %v303 = vand.u32 %v302, 4294901760
  %304 = vmatpush1.msra.mxu0 %v303
  %305 = vmatprep.subr.mxu0 0.0
  %v306 = vand.u32 %v41, 4294901760
  %v307 = vsub.f32 %v41, %v306
  %v308 = vand.u32 %v307, 4294901760
  %v309 = vsub.f32 %v307, %v308
  %v310 = vand.u32 %v309, 4294901760
  %311 = vmatpush1.msra.mxu0 %v310
  %312 = vmatprep.subr.mxu0 0.0
  %v313 = vand.u32 %v42, 4294901760
  %v314 = vsub.f32 %v42, %v313
  %v315 = vand.u32 %v314, 4294901760
  %v316 = vsub.f32 %v314, %v315
  %v317 = vand.u32 %v316, 4294901760
  %318 = vmatpush1.msra.mxu0 %v317
  %319 = vmatprep.subr.mxu0 0.0
  %v320 = vand.u32 %v43, 4294901760
  %v321 = vsub.f32 %v43, %v320
  %v322 = vand.u32 %v321, 4294901760
  %v323 = vsub.f32 %v321, %v322
  %v324 = vand.u32 %v323, 4294901760
  %325 = vmatpush1.msra.mxu0 %v324
  %326 = vmatprep.subr.mxu0 0.0
  %v327 = vand.u32 %v44, 4294901760
  %v328 = vsub.f32 %v44, %v327
  %v329 = vand.u32 %v328, 4294901760
  %v330 = vsub.f32 %v328, %v329
  %v331 = vand.u32 %v330, 4294901760
  %332 = vmatpush1.msra.mxu0 %v331
  %333 = vmatprep.subr.mxu0 0.0
  %v334 = vand.u32 %v45, 4294901760
  %v335 = vsub.f32 %v45, %v334
  %v336 = vand.u32 %v335, 4294901760
  %v337 = vsub.f32 %v335, %v336
  %v338 = vand.u32 %v337, 4294901760
  %339 = vmatpush1.msra.mxu0 %v338
  %340 = vmatprep.subr.mxu0 0.0
  %v341 = vand.u32 %v46, 4294901760
  %v342 = vsub.f32 %v46, %v341
  %v343 = vand.u32 %v342, 4294901760
  %v344 = vsub.f32 %v342, %v343
  %v345 = vand.u32 %v344, 4294901760
  %346 = vmatpush1.msra.mxu0 %v345
  %347 = vmatprep.subr.mxu0 0.0
  %v348 = vand.u32 %v47, 4294901760
  %v349 = vsub.f32 %v47, %v348
  %v350 = vand.u32 %v349, 4294901760
  %v351 = vsub.f32 %v349, %v350
  %v352 = vand.u32 %v351, 4294901760
  %353 = vmatpush1.msra.mxu0 %v352
  %354 = vmatprep.subr.mxu0 0.0
  %v355 = vand.u32 %v48, 4294901760
  %v356 = vsub.f32 %v48, %v355
  %v357 = vand.u32 %v356, 4294901760
  %v358 = vsub.f32 %v356, %v357
  %v359 = vand.u32 %v358, 4294901760
  %360 = vmatpush1.msra.mxu0 %v359
  %361 = vmatprep.subr.mxu0 0.0
  %v362 = vand.u32 %v49, 4294901760
  %v363 = vsub.f32 %v49, %v362
  %v364 = vand.u32 %v363, 4294901760
  %v365 = vsub.f32 %v363, %v364
  %v366 = vand.u32 %v365, 4294901760
  %367 = vmatpush1.msra.mxu0 %v366
  %368 = vmatprep.subr.mxu0 0.0
  %v369 = vand.u32 %v50, 4294901760
  %v370 = vsub.f32 %v50, %v369
  %v371 = vand.u32 %v370, 4294901760
  %v372 = vsub.f32 %v370, %v371
  %v373 = vand.u32 %v372, 4294901760
  %374 = vmatpush1.msra.mxu0 %v373
  %375 = vmatprep.subr.mxu0 0.0
  %v376 = vand.u32 %v51, 4294901760
  %v377 = vsub.f32 %v51, %v376
  %v378 = vand.u32 %v377, 4294901760
  %v379 = vsub.f32 %v377, %v378
  %v380 = vand.u32 %v379, 4294901760
  %381 = vmatpush1.msra.mxu0 %v380
  %382 = vmatprep.subr.mxu0 0.0
  %v383 = vand.u32 %v52, 4294901760
  %v384 = vsub.f32 %v52, %v383
  %v385 = vand.u32 %v384, 4294901760
  %v386 = vsub.f32 %v384, %v385
  %v387 = vand.u32 %v386, 4294901760
  %388 = vmatpush1.msra.mxu0 %v387
  %389 = vmatprep.subr.mxu0 0.0
  %v390 = vand.u32 %v53, 4294901760
  %v391 = vsub.f32 %v53, %v390
  %v392 = vand.u32 %v391, 4294901760
  %v393 = vsub.f32 %v391, %v392
  %v394 = vand.u32 %v393, 4294901760
  %395 = vmatpush1.msra.mxu0 %v394
  %396 = vmatprep.subr.mxu0 0.0
  %v397 = vand.u32 %v54, 4294901760
  %v398 = vsub.f32 %v54, %v397
  %v399 = vand.u32 %v398, 4294901760
  %v400 = vsub.f32 %v398, %v399
  %v401 = vand.u32 %v400, 4294901760
  %402 = vmatpush1.msra.mxu0 %v401
  %403 = vmatprep.subr.mxu0 0.0
  %v404 = vand.u32 %v55, 4294901760
  %v405 = vsub.f32 %v55, %v404
  %v406 = vand.u32 %v405, 4294901760
  %v407 = vsub.f32 %v405, %v406
  %v408 = vand.u32 %v407, 4294901760
  %409 = vmatpush1.msra.mxu0 %v408
  %410 = vmatprep.subr.mxu0 0.0
  %v411 = vand.u32 %v56, 4294901760
  %v412 = vsub.f32 %v56, %v411
  %v413 = vand.u32 %v412, 4294901760
  %v414 = vsub.f32 %v412, %v413
  %v415 = vand.u32 %v414, 4294901760
  %416 = vmatpush1.msra.mxu0 %v415
  %417 = vmatprep.subr.mxu0 0.0
  %v418 = vand.u32 %v57, 4294901760
  %v419 = vsub.f32 %v57, %v418
  %v420 = vand.u32 %v419, 4294901760
  %v421 = vsub.f32 %v419, %v420
  %v422 = vand.u32 %v421, 4294901760
  %423 = vmatpush1.msra.mxu0 %v422
  %v424 = vand.u32 %v21, 4294901760
  %425 = vmatprep.mubr.f32.mxu0 %v424
  %v426 = vand.u32 %v20, 4294901760
  %427 = vmatmul.mubr.f32.gmra.mrb[0].mxu0 %v426
  %v428 = vpop.f32.mrb[0].mxu0
  %v429 = vadd.f32 %v167, %v428
  %v430 = vpop.f32.mrb[0].mxu0
  %v431 = vand.u32 %v23, 4294901760
  %432 = vmatprep.mubr.f32.mxu0 %v431
  %v433 = vand.u32 %v22, 4294901760
  %434 = vmatmul.mubr.f32.gmra.mrb[0].mxu0 %v433
  %v435 = vpop.f32.mrb[0].mxu0
  %v436 = vadd.f32 %v182, %v435
  %v437 = vpop.f32.mrb[0].mxu0
  %v438 = vand.u32 %v25, 4294901760
  %439 = vmatprep.mubr.f32.mxu0 %v438
  %v440 = vand.u32 %v24, 4294901760
  %441 = vmatmul.mubr.f32.gmra.mrb[0].mxu0 %v440
  %v442 = vpop.f32.mrb[0].mxu0
  %v443 = vadd.f32 %v197, %v442
  %v444 = vpop.f32.mrb[0].mxu0
  %445 = vdwg.mxu0
  %446 = vmatprep.subr.mxu0 0.0
  %v447 = vand.u32 %v26, 4294901760
  %v448 = vsub.f32 %v26, %v447
  %449 = vmatpush1.msra.mxu0 %v448
  %450 = vmatprep.subr.mxu0 0.0
  %v451 = vand.u32 %v27, 4294901760
  %v452 = vsub.f32 %v27, %v451
  %453 = vmatpush1.msra.mxu0 %v452
  %454 = vmatprep.subr.mxu0 0.0
  %v455 = vand.u32 %v28, 4294901760
  %v456 = vsub.f32 %v28, %v455
  %457 = vmatpush1.msra.mxu0 %v456
  %458 = vmatprep.subr.mxu0 0.0
  %v459 = vand.u32 %v29, 4294901760
  %v460 = vsub.f32 %v29, %v459
  %461 = vmatpush1.msra.mxu0 %v460
  %462 = vmatprep.subr.mxu0 0.0
  %v463 = vand.u32 %v30, 4294901760
  %v464 = vsub.f32 %v30, %v463
  %465 = vmatpush1.msra.mxu0 %v464
  %466 = vmatprep.subr.mxu0 0.0
  %v467 = vand.u32 %v31, 4294901760
  %v468 = vsub.f32 %v31, %v467
  %469 = vmatpush1.msra.mxu0 %v468
  %470 = vmatprep.subr.mxu0 0.0
  %v471 = vand.u32 %v32, 4294901760
  %v472 = vsub.f32 %v32, %v471
  %473 = vmatpush1.msra.mxu0 %v472
  %474 = vmatprep.subr.mxu0 0.0
  %v475 = vand.u32 %v33, 4294901760
  %v476 = vsub.f32 %v33, %v475
  %477 = vmatpush1.msra.mxu0 %v476
  %478 = vmatprep.subr.mxu0 0.0
  %v479 = vand.u32 %v34, 4294901760
  %v480 = vsub.f32 %v34, %v479
  %481 = vmatpush1.msra.mxu0 %v480
  %482 = vmatprep.subr.mxu0 0.0
  %v483 = vand.u32 %v35, 4294901760
  %v484 = vsub.f32 %v35, %v483
  %485 = vmatpush1.msra.mxu0 %v484
  %486 = vmatprep.subr.mxu0 0.0
  %v487 = vand.u32 %v36, 4294901760
  %v488 = vsub.f32 %v36, %v487
  %489 = vmatpush1.msra.mxu0 %v488
  %490 = vmatprep.subr.mxu0 0.0
  %v491 = vand.u32 %v37, 4294901760
  %v492 = vsub.f32 %v37, %v491
  %493 = vmatpush1.msra.mxu0 %v492
  %494 = vmatprep.subr.mxu0 0.0
  %v495 = vand.u32 %v38, 4294901760
  %v496 = vsub.f32 %v38, %v495
  %497 = vmatpush1.msra.mxu0 %v496
  %498 = vmatprep.subr.mxu0 0.0
  %v499 = vand.u32 %v39, 4294901760
  %v500 = vsub.f32 %v39, %v499
  %501 = vmatpush1.msra.mxu0 %v500
  %502 = vmatprep.subr.mxu0 0.0
  %v503 = vand.u32 %v40, 4294901760
  %v504 = vsub.f32 %v40, %v503
  %505 = vmatpush1.msra.mxu0 %v504
  %506 = vmatprep.subr.mxu0 0.0
  %v507 = vand.u32 %v41, 4294901760
  %v508 = vsub.f32 %v41, %v507
  %509 = vmatpush1.msra.mxu0 %v508
  %510 = vmatprep.subr.mxu0 0.0
  %v511 = vand.u32 %v42, 4294901760
  %v512 = vsub.f32 %v42, %v511
  %513 = vmatpush1.msra.mxu0 %v512
  %514 = vmatprep.subr.mxu0 0.0
  %v515 = vand.u32 %v43, 4294901760
  %v516 = vsub.f32 %v43, %v515
  %517 = vmatpush1.msra.mxu0 %v516
  %518 = vmatprep.subr.mxu0 0.0
  %v519 = vand.u32 %v44, 4294901760
  %v520 = vsub.f32 %v44, %v519
  %521 = vmatpush1.msra.mxu0 %v520
  %522 = vmatprep.subr.mxu0 0.0
  %v523 = vand.u32 %v45, 4294901760
  %v524 = vsub.f32 %v45, %v523
  %525 = vmatpush1.msra.mxu0 %v524
  %526 = vmatprep.subr.mxu0 0.0
  %v527 = vand.u32 %v46, 4294901760
  %v528 = vsub.f32 %v46, %v527
  %529 = vmatpush1.msra.mxu0 %v528
  %530 = vmatprep.subr.mxu0 0.0
  %v531 = vand.u32 %v47, 4294901760
  %v532 = vsub.f32 %v47, %v531
  %533 = vmatpush1.msra.mxu0 %v532
  %534 = vmatprep.subr.mxu0 0.0
  %v535 = vand.u32 %v48, 4294901760
  %v536 = vsub.f32 %v48, %v535
  %537 = vmatpush1.msra.mxu0 %v536
  %538 = vmatprep.subr.mxu0 0.0
  %v539 = vand.u32 %v49, 4294901760
  %v540 = vsub.f32 %v49, %v539
  %541 = vmatpush1.msra.mxu0 %v540
  %542 = vmatprep.subr.mxu0 0.0
  %v543 = vand.u32 %v50, 4294901760
  %v544 = vsub.f32 %v50, %v543
  %545 = vmatpush1.msra.mxu0 %v544
  %546 = vmatprep.subr.mxu0 0.0
  %v547 = vand.u32 %v51, 4294901760
  %v548 = vsub.f32 %v51, %v547
  %549 = vmatpush1.msra.mxu0 %v548
  %550 = vmatprep.subr.mxu0 0.0
  %v551 = vand.u32 %v52, 4294901760
  %v552 = vsub.f32 %v52, %v551
  %553 = vmatpush1.msra.mxu0 %v552
  %554 = vmatprep.subr.mxu0 0.0
  %v555 = vand.u32 %v53, 4294901760
  %v556 = vsub.f32 %v53, %v555
  %557 = vmatpush1.msra.mxu0 %v556
  %558 = vmatprep.subr.mxu0 0.0
  %v559 = vand.u32 %v54, 4294901760
  %v560 = vsub.f32 %v54, %v559
  %561 = vmatpush1.msra.mxu0 %v560
  %562 = vmatprep.subr.mxu0 0.0
  %v563 = vand.u32 %v55, 4294901760
  %v564 = vsub.f32 %v55, %v563
  %565 = vmatpush1.msra.mxu0 %v564
  %566 = vmatprep.subr.mxu0 0.0
  %v567 = vand.u32 %v56, 4294901760
  %v568 = vsub.f32 %v56, %v567
  %569 = vmatpush1.msra.mxu0 %v568
  %570 = vmatprep.subr.mxu0 0.0
  %v571 = vand.u32 %v57, 4294901760
  %v572 = vsub.f32 %v57, %v571
  %573 = vmatpush1.msra.mxu0 %v572
  %v574 = vand.u32 %v21, 4294901760
  %v575 = vsub.f32 %v21, %v574
  %576 = vmatprep.mubr.f32.mxu0 %v575
  %v577 = vand.u32 %v20, 4294901760
  %v578 = vsub.f32 %v20, %v577
  %579 = vmatmul.mubr.f32.gmra.mrb[0].mxu0 %v578
  %v580 = vpop.f32.mrb[0].mxu0
  %v581 = vadd.f32 %v429, %v580
  %v582 = vpop.f32.mrb[0].mxu0
  %v583 = vand.u32 %v23, 4294901760
  %v584 = vsub.f32 %v23, %v583
  %585 = vmatprep.mubr.f32.mxu0 %v584
  %v586 = vand.u32 %v22, 4294901760
  %v587 = vsub.f32 %v22, %v586
  %588 = vmatmul.mubr.f32.gmra.mrb[0].mxu0 %v587
  %v589 = vpop.f32.mrb[0].mxu0
  %v590 = vadd.f32 %v436, %v589
  %v591 = vpop.f32.mrb[0].mxu0
  %v592 = vand.u32 %v25, 4294901760
  %v593 = vsub.f32 %v25, %v592
  %594 = vmatprep.mubr.f32.mxu0 %v593
  %v595 = vand.u32 %v24, 4294901760
  %v596 = vsub.f32 %v24, %v595
  %597 = vmatmul.mubr.f32.gmra.mrb[0].mxu0 %v596
  %v598 = vpop.f32.mrb[0].mxu0
  %v599 = vadd.f32 %v443, %v598
  %v600 = vpop.f32.mrb[0].mxu0
  %601 = vdwg.mxu0
  %602 = vmatprep.subr.mxu0 0.0
  %v603 = vand.u32 %v26, 4294901760
  %604 = vmatpush1.msra.mxu0 %v603
  %605 = vmatprep.subr.mxu0 0.0
  %v606 = vand.u32 %v27, 4294901760
  %607 = vmatpush1.msra.mxu0 %v606
  %608 = vmatprep.subr.mxu0 0.0
  %v609 = vand.u32 %v28, 4294901760
  %610 = vmatpush1.msra.mxu0 %v609
  %611 = vmatprep.subr.mxu0 0.0
  %v612 = vand.u32 %v29, 4294901760
  %613 = vmatpush1.msra.mxu0 %v612
  %614 = vmatprep.subr.mxu0 0.0
  %v615 = vand.u32 %v30, 4294901760
  %616 = vmatpush1.msra.mxu0 %v615
  %617 = vmatprep.subr.mxu0 0.0
  %v618 = vand.u32 %v31, 4294901760
  %619 = vmatpush1.msra.mxu0 %v618
  %620 = vmatprep.subr.mxu0 0.0
  %v621 = vand.u32 %v32, 4294901760
  %622 = vmatpush1.msra.mxu0 %v621
  %623 = vmatprep.subr.mxu0 0.0
  %v624 = vand.u32 %v33, 4294901760
  %625 = vmatpush1.msra.mxu0 %v624
  %626 = vmatprep.subr.mxu0 0.0
  %v627 = vand.u32 %v34, 4294901760
  %628 = vmatpush1.msra.mxu0 %v627
  %629 = vmatprep.subr.mxu0 0.0
  %v630 = vand.u32 %v35, 4294901760
  %631 = vmatpush1.msra.mxu0 %v630
  %632 = vmatprep.subr.mxu0 0.0
  %v633 = vand.u32 %v36, 4294901760
  %634 = vmatpush1.msra.mxu0 %v633
  %635 = vmatprep.subr.mxu0 0.0
  %v636 = vand.u32 %v37, 4294901760
  %637 = vmatpush1.msra.mxu0 %v636
  %638 = vmatprep.subr.mxu0 0.0
  %v639 = vand.u32 %v38, 4294901760
  %640 = vmatpush1.msra.mxu0 %v639
  %641 = vmatprep.subr.mxu0 0.0
  %v642 = vand.u32 %v39, 4294901760
  %643 = vmatpush1.msra.mxu0 %v642
  %644 = vmatprep.subr.mxu0 0.0
  %v645 = vand.u32 %v40, 4294901760
  %646 = vmatpush1.msra.mxu0 %v645
  %647 = vmatprep.subr.mxu0 0.0
  %v648 = vand.u32 %v41, 4294901760
  %649 = vmatpush1.msra.mxu0 %v648
  %650 = vmatprep.subr.mxu0 0.0
  %v651 = vand.u32 %v42, 4294901760
  %652 = vmatpush1.msra.mxu0 %v651
  %653 = vmatprep.subr.mxu0 0.0
  %v654 = vand.u32 %v43, 4294901760
  %655 = vmatpush1.msra.mxu0 %v654
  %656 = vmatprep.subr.mxu0 0.0
  %v657 = vand.u32 %v44, 4294901760
  %658 = vmatpush1.msra.mxu0 %v657
  %659 = vmatprep.subr.mxu0 0.0
  %v660 = vand.u32 %v45, 4294901760
  %661 = vmatpush1.msra.mxu0 %v660
  %662 = vmatprep.subr.mxu0 0.0
  %v663 = vand.u32 %v46, 4294901760
  %664 = vmatpush1.msra.mxu0 %v663
  %665 = vmatprep.subr.mxu0 0.0
  %v666 = vand.u32 %v47, 4294901760
  %667 = vmatpush1.msra.mxu0 %v666
  %668 = vmatprep.subr.mxu0 0.0
  %v669 = vand.u32 %v48, 4294901760
  %670 = vmatpush1.msra.mxu0 %v669
  %671 = vmatprep.subr.mxu0 0.0
  %v672 = vand.u32 %v49, 4294901760
  %673 = vmatpush1.msra.mxu0 %v672
  %674 = vmatprep.subr.mxu0 0.0
  %v675 = vand.u32 %v50, 4294901760
  %676 = vmatpush1.msra.mxu0 %v675
  %677 = vmatprep.subr.mxu0 0.0
  %v678 = vand.u32 %v51, 4294901760
  %679 = vmatpush1.msra.mxu0 %v678
  %680 = vmatprep.subr.mxu0 0.0
  %v681 = vand.u32 %v52, 4294901760
  %682 = vmatpush1.msra.mxu0 %v681
  %683 = vmatprep.subr.mxu0 0.0
  %v684 = vand.u32 %v53, 4294901760
  %685 = vmatpush1.msra.mxu0 %v684
  %686 = vmatprep.subr.mxu0 0.0
  %v687 = vand.u32 %v54, 4294901760
  %688 = vmatpush1.msra.mxu0 %v687
  %689 = vmatprep.subr.mxu0 0.0
  %v690 = vand.u32 %v55, 4294901760
  %691 = vmatpush1.msra.mxu0 %v690
  %692 = vmatprep.subr.mxu0 0.0
  %v693 = vand.u32 %v56, 4294901760
  %694 = vmatpush1.msra.mxu0 %v693
  %695 = vmatprep.subr.mxu0 0.0
  %v696 = vand.u32 %v57, 4294901760
  %697 = vmatpush1.msra.mxu0 %v696
  %v698 = vand.u32 %v21, 4294901760
  %v699 = vsub.f32 %v21, %v698
  %v700 = vand.u32 %v699, 4294901760
  %701 = vmatprep.mubr.f32.mxu0 %v700
  %v702 = vand.u32 %v20, 4294901760
  %v703 = vsub.f32 %v20, %v702
  %v704 = vand.u32 %v703, 4294901760
  %705 = vmatmul.mubr.f32.gmra.mrb[0].mxu0 %v704
  %v706 = vpop.f32.mrb[0].mxu0
  %v707 = vadd.f32 %v581, %v706
  %v708 = vpop.f32.mrb[0].mxu0
  %v709 = vand.u32 %v23, 4294901760
  %v710 = vsub.f32 %v23, %v709
  %v711 = vand.u32 %v710, 4294901760
  %712 = vmatprep.mubr.f32.mxu0 %v711
  %v713 = vand.u32 %v22, 4294901760
  %v714 = vsub.f32 %v22, %v713
  %v715 = vand.u32 %v714, 4294901760
  %716 = vmatmul.mubr.f32.gmra.mrb[0].mxu0 %v715
  %v717 = vpop.f32.mrb[0].mxu0
  %v718 = vadd.f32 %v590, %v717
  %v719 = vpop.f32.mrb[0].mxu0
  %v720 = vand.u32 %v25, 4294901760
  %v721 = vsub.f32 %v25, %v720
  %v722 = vand.u32 %v721, 4294901760
  %723 = vmatprep.mubr.f32.mxu0 %v722
  %v724 = vand.u32 %v24, 4294901760
  %v725 = vsub.f32 %v24, %v724
  %v726 = vand.u32 %v725, 4294901760
  %727 = vmatmul.mubr.f32.gmra.mrb[0].mxu0 %v726
  %v728 = vpop.f32.mrb[0].mxu0
  %v729 = vadd.f32 %v599, %v728
  %v730 = vpop.f32.mrb[0].mxu0
  %731 = vdwg.mxu0
  %732 = vmatprep.subr.mxu0 0.0
  %v733 = vand.u32 %v26, 4294901760
  %v734 = vsub.f32 %v26, %v733
  %v735 = vand.u32 %v734, 4294901760
  %736 = vmatpush1.msra.mxu0 %v735
  %737 = vmatprep.subr.mxu0 0.0
  %v738 = vand.u32 %v27, 4294901760
  %v739 = vsub.f32 %v27, %v738
  %v740 = vand.u32 %v739, 4294901760
  %741 = vmatpush1.msra.mxu0 %v740
  %742 = vmatprep.subr.mxu0 0.0
  %v743 = vand.u32 %v28, 4294901760
  %v744 = vsub.f32 %v28, %v743
  %v745 = vand.u32 %v744, 4294901760
  %746 = vmatpush1.msra.mxu0 %v745
  %747 = vmatprep.subr.mxu0 0.0
  %v748 = vand.u32 %v29, 4294901760
  %v749 = vsub.f32 %v29, %v748
  %v750 = vand.u32 %v749, 4294901760
  %751 = vmatpush1.msra.mxu0 %v750
  %752 = vmatprep.subr.mxu0 0.0
  %v753 = vand.u32 %v30, 4294901760
  %v754 = vsub.f32 %v30, %v753
  %v755 = vand.u32 %v754, 4294901760
  %756 = vmatpush1.msra.mxu0 %v755
  %757 = vmatprep.subr.mxu0 0.0
  %v758 = vand.u32 %v31, 4294901760
  %v759 = vsub.f32 %v31, %v758
  %v760 = vand.u32 %v759, 4294901760
  %761 = vmatpush1.msra.mxu0 %v760
  %762 = vmatprep.subr.mxu0 0.0
  %v763 = vand.u32 %v32, 4294901760
  %v764 = vsub.f32 %v32, %v763
  %v765 = vand.u32 %v764, 4294901760
  %766 = vmatpush1.msra.mxu0 %v765
  %767 = vmatprep.subr.mxu0 0.0
  %v768 = vand.u32 %v33, 4294901760
  %v769 = vsub.f32 %v33, %v768
  %v770 = vand.u32 %v769, 4294901760
  %771 = vmatpush1.msra.mxu0 %v770
  %772 = vmatprep.subr.mxu0 0.0
  %v773 = vand.u32 %v34, 4294901760
  %v774 = vsub.f32 %v34, %v773
  %v775 = vand.u32 %v774, 4294901760
  %776 = vmatpush1.msra.mxu0 %v775
  %777 = vmatprep.subr.mxu0 0.0
  %v778 = vand.u32 %v35, 4294901760
  %v779 = vsub.f32 %v35, %v778
  %v780 = vand.u32 %v779, 4294901760
  %781 = vmatpush1.msra.mxu0 %v780
  %782 = vmatprep.subr.mxu0 0.0
  %v783 = vand.u32 %v36, 4294901760
  %v784 = vsub.f32 %v36, %v783
  %v785 = vand.u32 %v784, 4294901760
  %786 = vmatpush1.msra.mxu0 %v785
  %787 = vmatprep.subr.mxu0 0.0
  %v788 = vand.u32 %v37, 4294901760
  %v789 = vsub.f32 %v37, %v788
  %v790 = vand.u32 %v789, 4294901760
  %791 = vmatpush1.msra.mxu0 %v790
  %792 = vmatprep.subr.mxu0 0.0
  %v793 = vand.u32 %v38, 4294901760
  %v794 = vsub.f32 %v38, %v793
  %v795 = vand.u32 %v794, 4294901760
  %796 = vmatpush1.msra.mxu0 %v795
  %797 = vmatprep.subr.mxu0 0.0
  %v798 = vand.u32 %v39, 4294901760
  %v799 = vsub.f32 %v39, %v798
  %v800 = vand.u32 %v799, 4294901760
  %801 = vmatpush1.msra.mxu0 %v800
  %802 = vmatprep.subr.mxu0 0.0
  %v803 = vand.u32 %v40, 4294901760
  %v804 = vsub.f32 %v40, %v803
  %v805 = vand.u32 %v804, 4294901760
  %806 = vmatpush1.msra.mxu0 %v805
  %807 = vmatprep.subr.mxu0 0.0
  %v808 = vand.u32 %v41, 4294901760
  %v809 = vsub.f32 %v41, %v808
  %v810 = vand.u32 %v809, 4294901760
  %811 = vmatpush1.msra.mxu0 %v810
  %812 = vmatprep.subr.mxu0 0.0
  %v813 = vand.u32 %v42, 4294901760
  %v814 = vsub.f32 %v42, %v813
  %v815 = vand.u32 %v814, 4294901760
  %816 = vmatpush1.msra.mxu0 %v815
  %817 = vmatprep.subr.mxu0 0.0
  %v818 = vand.u32 %v43, 4294901760
  %v819 = vsub.f32 %v43, %v818
  %v820 = vand.u32 %v819, 4294901760
  %821 = vmatpush1.msra.mxu0 %v820
  %822 = vmatprep.subr.mxu0 0.0
  %v823 = vand.u32 %v44, 4294901760
  %v824 = vsub.f32 %v44, %v823
  %v825 = vand.u32 %v824, 4294901760
  %826 = vmatpush1.msra.mxu0 %v825
  %827 = vmatprep.subr.mxu0 0.0
  %v828 = vand.u32 %v45, 4294901760
  %v829 = vsub.f32 %v45, %v828
  %v830 = vand.u32 %v829, 4294901760
  %831 = vmatpush1.msra.mxu0 %v830
  %832 = vmatprep.subr.mxu0 0.0
  %v833 = vand.u32 %v46, 4294901760
  %v834 = vsub.f32 %v46, %v833
  %v835 = vand.u32 %v834, 4294901760
  %836 = vmatpush1.msra.mxu0 %v835
  %837 = vmatprep.subr.mxu0 0.0
  %v838 = vand.u32 %v47, 4294901760
  %v839 = vsub.f32 %v47, %v838
  %v840 = vand.u32 %v839, 4294901760
  %841 = vmatpush1.msra.mxu0 %v840
  %842 = vmatprep.subr.mxu0 0.0
  %v843 = vand.u32 %v48, 4294901760
  %v844 = vsub.f32 %v48, %v843
  %v845 = vand.u32 %v844, 4294901760
  %846 = vmatpush1.msra.mxu0 %v845
  %847 = vmatprep.subr.mxu0 0.0
  %v848 = vand.u32 %v49, 4294901760
  %v849 = vsub.f32 %v49, %v848
  %v850 = vand.u32 %v849, 4294901760
  %851 = vmatpush1.msra.mxu0 %v850
  %852 = vmatprep.subr.mxu0 0.0
  %v853 = vand.u32 %v50, 4294901760
  %v854 = vsub.f32 %v50, %v853
  %v855 = vand.u32 %v854, 4294901760
  %856 = vmatpush1.msra.mxu0 %v855
  %857 = vmatprep.subr.mxu0 0.0
  %v858 = vand.u32 %v51, 4294901760
  %v859 = vsub.f32 %v51, %v858
  %v860 = vand.u32 %v859, 4294901760
  %861 = vmatpush1.msra.mxu0 %v860
  %862 = vmatprep.subr.mxu0 0.0
  %v863 = vand.u32 %v52, 4294901760
  %v864 = vsub.f32 %v52, %v863
  %v865 = vand.u32 %v864, 4294901760
  %866 = vmatpush1.msra.mxu0 %v865
  %867 = vmatprep.subr.mxu0 0.0
  %v868 = vand.u32 %v53, 4294901760
  %v869 = vsub.f32 %v53, %v868
  %v870 = vand.u32 %v869, 4294901760
  %871 = vmatpush1.msra.mxu0 %v870
  %872 = vmatprep.subr.mxu0 0.0
  %v873 = vand.u32 %v54, 4294901760
  %v874 = vsub.f32 %v54, %v873
  %v875 = vand.u32 %v874, 4294901760
  %876 = vmatpush1.msra.mxu0 %v875
  %877 = vmatprep.subr.mxu0 0.0
  %v878 = vand.u32 %v55, 4294901760
  %v879 = vsub.f32 %v55, %v878
  %v880 = vand.u32 %v879, 4294901760
  %881 = vmatpush1.msra.mxu0 %v880
  %882 = vmatprep.subr.mxu0 0.0
  %v883 = vand.u32 %v56, 4294901760
  %v884 = vsub.f32 %v56, %v883
  %v885 = vand.u32 %v884, 4294901760
  %886 = vmatpush1.msra.mxu0 %v885
  %887 = vmatprep.subr.mxu0 0.0
  %v888 = vand.u32 %v57, 4294901760
  %v889 = vsub.f32 %v57, %v888
  %v890 = vand.u32 %v889, 4294901760
  %891 = vmatpush1.msra.mxu0 %v890
  %v892 = vand.u32 %v21, 4294901760
  %893 = vmatprep.mubr.f32.mxu0 %v892
  %v894 = vand.u32 %v20, 4294901760
  %895 = vmatmul.mubr.f32.gmra.mrb[0].mxu0 %v894
  %v896 = vpop.f32.mrb[0].mxu0
  %v897 = vadd.f32 %v707, %v896
  %v898 = vpop.f32.mrb[0].mxu0
  %v899 = vand.u32 %v23, 4294901760
  %900 = vmatprep.mubr.f32.mxu0 %v899
  %v901 = vand.u32 %v22, 4294901760
  %902 = vmatmul.mubr.f32.gmra.mrb[0].mxu0 %v901
  %v903 = vpop.f32.mrb[0].mxu0
  %v904 = vadd.f32 %v718, %v903
  %v905 = vpop.f32.mrb[0].mxu0
  %v906 = vand.u32 %v25, 4294901760
  %907 = vmatprep.mubr.f32.mxu0 %v906
  %v908 = vand.u32 %v24, 4294901760
  %909 = vmatmul.mubr.f32.gmra.mrb[0].mxu0 %v908
  %v910 = vpop.f32.mrb[0].mxu0
  %v911 = vadd.f32 %v729, %v910
  %v912 = vpop.f32.mrb[0].mxu0
  %913 = vdwg.mxu0
  %914 = vmatprep.subr.mxu0 0.0
  %v915 = vand.u32 %v26, 4294901760
  %916 = vmatpush1.msra.mxu0 %v915
  %917 = vmatprep.subr.mxu0 0.0
  %v918 = vand.u32 %v27, 4294901760
  %919 = vmatpush1.msra.mxu0 %v918
  %920 = vmatprep.subr.mxu0 0.0
  %v921 = vand.u32 %v28, 4294901760
  %922 = vmatpush1.msra.mxu0 %v921
  %923 = vmatprep.subr.mxu0 0.0
  %v924 = vand.u32 %v29, 4294901760
  %925 = vmatpush1.msra.mxu0 %v924
  %926 = vmatprep.subr.mxu0 0.0
  %v927 = vand.u32 %v30, 4294901760
  %928 = vmatpush1.msra.mxu0 %v927
  %929 = vmatprep.subr.mxu0 0.0
  %v930 = vand.u32 %v31, 4294901760
  %931 = vmatpush1.msra.mxu0 %v930
  %932 = vmatprep.subr.mxu0 0.0
  %v933 = vand.u32 %v32, 4294901760
  %934 = vmatpush1.msra.mxu0 %v933
  %935 = vmatprep.subr.mxu0 0.0
  %v936 = vand.u32 %v33, 4294901760
  %937 = vmatpush1.msra.mxu0 %v936
  %938 = vmatprep.subr.mxu0 0.0
  %v939 = vand.u32 %v34, 4294901760
  %940 = vmatpush1.msra.mxu0 %v939
  %941 = vmatprep.subr.mxu0 0.0
  %v942 = vand.u32 %v35, 4294901760
  %943 = vmatpush1.msra.mxu0 %v942
  %944 = vmatprep.subr.mxu0 0.0
  %v945 = vand.u32 %v36, 4294901760
  %946 = vmatpush1.msra.mxu0 %v945
  %947 = vmatprep.subr.mxu0 0.0
  %v948 = vand.u32 %v37, 4294901760
  %949 = vmatpush1.msra.mxu0 %v948
  %950 = vmatprep.subr.mxu0 0.0
  %v951 = vand.u32 %v38, 4294901760
  %952 = vmatpush1.msra.mxu0 %v951
  %953 = vmatprep.subr.mxu0 0.0
  %v954 = vand.u32 %v39, 4294901760
  %955 = vmatpush1.msra.mxu0 %v954
  %956 = vmatprep.subr.mxu0 0.0
  %v957 = vand.u32 %v40, 4294901760
  %958 = vmatpush1.msra.mxu0 %v957
  %959 = vmatprep.subr.mxu0 0.0
  %v960 = vand.u32 %v41, 4294901760
  %961 = vmatpush1.msra.mxu0 %v960
  %962 = vmatprep.subr.mxu0 0.0
  %v963 = vand.u32 %v42, 4294901760
  %964 = vmatpush1.msra.mxu0 %v963
  %965 = vmatprep.subr.mxu0 0.0
  %v966 = vand.u32 %v43, 4294901760
  %967 = vmatpush1.msra.mxu0 %v966
  %968 = vmatprep.subr.mxu0 0.0
  %v969 = vand.u32 %v44, 4294901760
  %970 = vmatpush1.msra.mxu0 %v969
  %971 = vmatprep.subr.mxu0 0.0
  %v972 = vand.u32 %v45, 4294901760
  %973 = vmatpush1.msra.mxu0 %v972
  %974 = vmatprep.subr.mxu0 0.0
  %v975 = vand.u32 %v46, 4294901760
  %976 = vmatpush1.msra.mxu0 %v975
  %977 = vmatprep.subr.mxu0 0.0
  %v978 = vand.u32 %v47, 4294901760
  %979 = vmatpush1.msra.mxu0 %v978
  %980 = vmatprep.subr.mxu0 0.0
  %v981 = vand.u32 %v48, 4294901760
  %982 = vmatpush1.msra.mxu0 %v981
  %983 = vmatprep.subr.mxu0 0.0
  %v984 = vand.u32 %v49, 4294901760
  %985 = vmatpush1.msra.mxu0 %v984
  %986 = vmatprep.subr.mxu0 0.0
  %v987 = vand.u32 %v50, 4294901760
  %988 = vmatpush1.msra.mxu0 %v987
  %989 = vmatprep.subr.mxu0 0.0
  %v990 = vand.u32 %v51, 4294901760
  %991 = vmatpush1.msra.mxu0 %v990
  %992 = vmatprep.subr.mxu0 0.0
  %v993 = vand.u32 %v52, 4294901760
  %994 = vmatpush1.msra.mxu0 %v993
  %995 = vmatprep.subr.mxu0 0.0
  %v996 = vand.u32 %v53, 4294901760
  %997 = vmatpush1.msra.mxu0 %v996
  %998 = vmatprep.subr.mxu0 0.0
  %v999 = vand.u32 %v54, 4294901760
  %1000 = vmatpush1.msra.mxu0 %v999
  %1001 = vmatprep.subr.mxu0 0.0
  %v1002 = vand.u32 %v55, 4294901760
  %1003 = vmatpush1.msra.mxu0 %v1002
  %1004 = vmatprep.subr.mxu0 0.0
  %v1005 = vand.u32 %v56, 4294901760
  %1006 = vmatpush1.msra.mxu0 %v1005
  %1007 = vmatprep.subr.mxu0 0.0
  %v1008 = vand.u32 %v57, 4294901760
  %1009 = vmatpush1.msra.mxu0 %v1008
  %v1010 = vand.u32 %v21, 4294901760
  %1011 = vmatprep.mubr.f32.mxu0 %v1010
  %v1012 = vand.u32 %v20, 4294901760
  %1013 = vmatmul.mubr.f32.gmra.mrb[0].mxu0 %v1012
  %v1014 = vpop.f32.mrb[0].mxu0
  %v1015 = vadd.f32 %v897, %v1014
  %v1016 = vpop.f32.mrb[0].mxu0
  %v1017 = vand.u32 %v23, 4294901760
  %1018 = vmatprep.mubr.f32.mxu0 %v1017
  %v1019 = vand.u32 %v22, 4294901760
  %1020 = vmatmul.mubr.f32.gmra.mrb[0].mxu0 %v1019
  %v1021 = vpop.f32.mrb[0].mxu0
  %v1022 = vadd.f32 %v904, %v1021
  %v1023 = vpop.f32.mrb[0].mxu0
  %v1024 = vand.u32 %v25, 4294901760
  %1025 = vmatprep.mubr.f32.mxu0 %v1024
  %v1026 = vand.u32 %v24, 4294901760
  %1027 = vmatmul.mubr.f32.gmra.mrb[0].mxu0 %v1026
  %v1028 = vpop.f32.mrb[0].mxu0
  %v1029 = vadd.f32 %v911, %v1028
  %v1030 = vpop.f32.mrb[0].mxu0
  %1031 = vdwg.mxu0
  %1032 = vst [vmem:[%s5] sm:$0xff] %v1015
  %1033 = vst [vmem:[%s5 + $0x8] sm:$0xff] %v1022
  %1034 = vst [vmem:[%s5 + $0x10] sm:$0x3] %v1029
  %v1035 = vld [vmem:[%s2] sm:$0xff]
  %v1036 = vld [vmem:[%s2 + $0x8] sm:$0xff]
  %v1037 = vld [vmem:[%s2 + $0x10] sm:$0xff]
  %v1038 = vld [vmem:[%s3] sm:$0xff]
  %v1039 = vld [vmem:[%s3 + $0x8] sm:$0xff]
  %v1040 = vld [vmem:[%s3 + $0x10] sm:$0xff]
  %1042 = vset.pattern.permute.xlu0 0
  %1043 = vperm.xlu0 %1042, %v1035
  %v1044 = vpop.permute.xlu0 %1043
  %1047 = vset.pattern.permute.xlu0 0
  %1048 = vperm.xlu0 %1047, %v1036
  %v1049 = vpop.permute.xlu0 %1048
  %1052 = vset.pattern.permute.xlu0 0
  %1053 = vperm.xlu0 %1052, %v1037
  %v1054 = vpop.permute.xlu0 %1053
  %v1056 = vmul.f32 %v1044, %v1038
  %v1057 = vmul.f32 %v1049, %v1039
  %v1058 = vmul.f32 %v1054, %v1040
  %s1059 = scalar_lea.vmem %s3, 24
  %v1060 = vld [vmem:[%s1059] sm:$0xff]
  %v1061 = vld [vmem:[%s1059 + $0x8] sm:$0xff]
  %v1062 = vld [vmem:[%s1059 + $0x10] sm:$0xff]
  %1063 = vset.pattern.permute.xlu0 1
  %1064 = vperm.xlu0 %1063, %v1035
  %v1065 = vpop.permute.xlu0 %1064
  %1067 = vset.pattern.permute.xlu0 1
  %1068 = vperm.xlu0 %1067, %v1036
  %v1069 = vpop.permute.xlu0 %1068
  %1071 = vset.pattern.permute.xlu0 1
  %1072 = vperm.xlu0 %1071, %v1037
  %v1073 = vpop.permute.xlu0 %1072
  %v1075 = vmul.f32 %v1065, %v1060
  %v1076 = vmul.f32 %v1069, %v1061
  %v1077 = vmul.f32 %v1073, %v1062
  %v1078 = vadd.f32 %v1056, %v1075
  %v1079 = vadd.f32 %v1057, %v1076
  %v1080 = vadd.f32 %v1058, %v1077
  %s1081 = scalar_lea.vmem %s3, 48
  %v1082 = vld [vmem:[%s1081] sm:$0xff]
  %v1083 = vld [vmem:[%s1081 + $0x8] sm:$0xff]
  %v1084 = vld [vmem:[%s1081 + $0x10] sm:$0xff]
  %1085 = vset.pattern.permute.xlu0 2
  %1086 = vperm.xlu0 %1085, %v1035
  %v1087 = vpop.permute.xlu0 %1086
  %1089 = vset.pattern.permute.xlu0 2
  %1090 = vperm.xlu0 %1089, %v1036
  %v1091 = vpop.permute.xlu0 %1090
  %1093 = vset.pattern.permute.xlu0 2
  %1094 = vperm.xlu0 %1093, %v1037
  %v1095 = vpop.permute.xlu0 %1094
  %v1097 = vmul.f32 %v1087, %v1082
  %v1098 = vmul.f32 %v1091, %v1083
  %v1099 = vmul.f32 %v1095, %v1084
  %v1100 = vadd.f32 %v1078, %v1097
  %v1101 = vadd.f32 %v1079, %v1098
  %v1102 = vadd.f32 %v1080, %v1099
  %s1103 = scalar_lea.vmem %s3, 72
  %v1104 = vld [vmem:[%s1103] sm:$0xff]
  %v1105 = vld [vmem:[%s1103 + $0x8] sm:$0xff]
  %v1106 = vld [vmem:[%s1103 + $0x10] sm:$0xff]
  %1107 = vset.pattern.permute.xlu0 3
  %1108 = vperm.xlu0 %1107, %v1035
  %v1109 = vpop.permute.xlu0 %1108
  %1111 = vset.pattern.permute.xlu0 3
  %1112 = vperm.xlu0 %1111, %v1036
  %v1113 = vpop.permute.xlu0 %1112
  %1115 = vset.pattern.permute.xlu0 3
  %1116 = vperm.xlu0 %1115, %v1037
  %v1117 = vpop.permute.xlu0 %1116
  %v1119 = vmul.f32 %v1109, %v1104
  %v1120 = vmul.f32 %v1113, %v1105
  %v1121 = vmul.f32 %v1117, %v1106
  %v1122 = vadd.f32 %v1100, %v1119
  %v1123 = vadd.f32 %v1101, %v1120
  %v1124 = vadd.f32 %v1102, %v1121
  %v1125 = vlaneseq
  %v1126 = vshrl.u32 %v1125, 7
  %v1127 = vadd.s32 %v1126, 8
  %v1128 = vadd.s32 %v1126, 16
  %vm1129 = vcmp.lt.s32.totalorder %v1126, 0
  %v1130 = vsub.s32 0, %v1126
  %v1131 = vsel %vm1129, %v1130, %v1126
  %v1132 = vshrl.u32 %v1131, 2
  %v1133 = vand.u32 %v1131, 3
  %v1134 = vsub.s32 0, %v1133
  %v1135 = vsel %vm1129, %v1134, %v1133
  %vm1136 = vcmp.lt.s32.totalorder %v1127, 0
  %v1137 = vsub.s32 0, %v1127
  %v1138 = vsel %vm1136, %v1137, %v1127
  %v1139 = vshrl.u32 %v1138, 2
  %v1140 = vand.u32 %v1138, 3
  %v1141 = vsub.s32 0, %v1140
  %v1142 = vsel %vm1136, %v1141, %v1140
  %vm1143 = vcmp.lt.s32.totalorder %v1128, 0
  %v1144 = vsub.s32 0, %v1128
  %v1145 = vsel %vm1143, %v1144, %v1128
  %v1146 = vshrl.u32 %v1145, 2
  %v1147 = vand.u32 %v1145, 3
  %v1148 = vsub.s32 0, %v1147
  %v1149 = vsel %vm1143, %v1148, %v1147
  %vm1150 = vcmp.ne.s32.totalorder %v1135, 0
  %vm1151 = vcmp.ne.s32.totalorder %v1142, 0
  %vm1152 = vcmp.ne.s32.totalorder %v1149, 0
  %vm1153 = vcmp.lt.s32.totalorder %v1135, 0
  %vm1154 = vcmp.lt.s32.totalorder %v1142, 0
  %vm1155 = vcmp.lt.s32.totalorder %v1149, 0
  %vm1156 = vmand %vm1153, %vm1150
  %vm1157 = vmand %vm1154, %vm1151
  %vm1158 = vmand %vm1155, %vm1152
  %v1159 = vadd.s32 %v1135, 4
  %v1160 = vadd.s32 %v1142, 4
  %v1161 = vadd.s32 %v1149, 4
  %v1162 = vsel %vm1156, %v1159, %v1135
  %v1163 = vsel %vm1157, %v1160, %v1142
  %v1164 = vsel %vm1158, %v1161, %v1149
  %vm1165 = vcmp.lt.s32.totalorder %v1162, 2
  %vm1166 = vcmp.lt.s32.totalorder %v1163, 2
  %vm1167 = vcmp.lt.s32.totalorder %v1164, 2
  %1168 = vst [vmem:[%s5 + $0x18] sm:$0xff] %v1122
  %1169 = vst [vmem:[%s5 + $0x20] sm:$0xff] %v1123
  %1170 = vst [vmem:[%s5 + $0x28] sm:$0xff] %v1124
  %v1171 = vmul.f32 %v1122, 0.5
  %v1172 = vmul.f32 %v1123, 0.5
  %v1173 = vmul.f32 %v1124, 0.5
  %v1174 = vsel %vm1165, %v1171, %v1122
  %v1175 = vsel %vm1166, %v1172, %v1123
  %v1176 = vsel %vm1167, %v1173, %v1124
  %1177 = vst [vmem:[%s5 + $0x30] sm:$0xff] %v1174
  %1178 = vst [vmem:[%s5 + $0x38] sm:$0xff] %v1175
  %1179 = vst [vmem:[%s5 + $0x40] sm:$0xff] %v1176
  %v1180 = vmul.f32 %v1122, 0.25
  %v1181 = vmul.f32 %v1123, 0.25
  %v1182 = vmul.f32 %v1124, 0.25
  %v1183 = vsel %vm1165, %v1180, %v1122
  %v1184 = vsel %vm1166, %v1181, %v1123
  %v1185 = vsel %vm1167, %v1182, %v1124
  %1186 = vst [vmem:[%s5 + $0x48] sm:$0xff] %v1183
  %1187 = vst [vmem:[%s5 + $0x50] sm:$0xff] %v1184
  %1188 = vst [vmem:[%s5 + $0x58] sm:$0xff] %v1185
  %v1189 = vmul.f32 %v1122, 0.125
  %v1190 = vmul.f32 %v1123, 0.125
  %v1191 = vmul.f32 %v1124, 0.125
  %v1192 = vsel %vm1165, %v1189, %v1122
  %v1193 = vsel %vm1166, %v1190, %v1123
  %v1194 = vsel %vm1167, %v1191, %v1124
  %1195 = vst [vmem:[%s5 + $0x60] sm:$0xff] %v1192
  %1196 = vst [vmem:[%s5 + $0x68] sm:$0xff] %v1193
  %1197 = vst [vmem:[%s5 + $0x70] sm:$0xff] %v1194
  %v1198 = vld [vmem:[%s4] sm:$0x3]
  %vm1199 = vcmask 58368
  %v1200 = vsel %vm1199, %v1198, inf
  %1201 = vmin.xlane.f32.xlu0 %v1200
  %v1202 = vpop.xlane.xlu0 %1201
  %v1203 = vsel %vm1199, %v1198, -inf
  %1204 = vmax.xlane.f32.xlu0 %v1203
  %v1205 = vpop.xlane.xlu0 %1204
  %v1206 = vlaneseq
  %v1207 = vand.u32 %v1206, 127
  %vm1208 = vcmp.eq.s32.totalorder %v1207, 0
  %v1209 = vsel %vm1208, %v1202, 0.0
  %vm1210 = vcmp.eq.s32.totalorder %v1207, 1
  %v1211 = vsel %vm1210, %v1205, 0.0
  %v1212 = vadd.f32 %v1209, %v1211
  %1213 = vst [vmem:[%s5 + $0x78] sm:$0x3] %v1212
  // Predicated region
  $region22: #{_simple_interface_preprocess.1} parent=0 // pred_check
    _
  $region23: #{_simple_interface_preprocess.1} parent=0 // pred_check_branch
    %1215 = sbr.rel (0) target = $region25
  $region24: #{_simple_interface_preprocess.1} parent=0 // pred_region
    _
  $region25: #{_simple_interface_preprocess.1} parent=0 // pred_fallthru
    _
  // Predicated region
  $region26: #{_simple_interface_preprocess.1} parent=0 // pred_check
    _
  $region27: #{_simple_interface_preprocess.1} parent=0 // pred_check_branch
    %1217 = sbr.rel (0) target = $region29
  $region28: #{_simple_interface_preprocess.1} parent=0 // pred_region
    _
  $region29: #{_simple_interface_preprocess.1} parent=0 // pred_fallthru
    _

</llo_original>
